<compile_context>
chip_gen: v5e
topology: v5e:2x2
jax: 0.10.0
libtpu: 0.0.40
codegen_flags: <defaults>
</compile_context>

<pallas_src>
import jax
import jax.numpy as jnp
from jax import lax
from jax.experimental import pallas as pl
from jax.experimental.pallas import tpu as pltpu


def _graphnet_kernel(x_ref, w_ref, aw2_ref, inv_ref, anchor_ref, const_ref,
                     nodes_ref, sa_ref):
    x_cn = x_ref[0]                    # (C, N)  float32, native layout
    w = w_ref[...]                     # (K, C)  inv^2
    aw2 = aw2_ref[...]                 # (K, C)  -2 * anchor * inv^2
    inv = inv_ref[...]                 # (K, C)  1 / (sigmoid(sigma) + 1e-7)
    a = anchor_ref[...]                # (K, C)
    const = const_ref[...]             # (K, 1)  sum_c anchor^2 * inv^2

    x2_cn = x_cn * x_cn                # (C, N)

    # Squared Mahalanobis-like distance expanded into two (K,C)x(C,N) matmuls.
    # Result is (K, N): lane-dense over N, K on sublanes.
    dist2 = (
        jnp.dot(w, x2_cn, preferred_element_type=jnp.float32)
        + jnp.dot(aw2, x_cn, preferred_element_type=jnp.float32)
        + const
    )                                  # (K, N)
    logits = -0.5 * dist2

    # Softmax over the node axis K (sublane axis).
    m = jnp.max(logits, axis=0, keepdims=True)        # (1, N)
    p = jnp.exp(logits - m)                           # (K, N)
    s = p * pl.reciprocal(jnp.sum(p, axis=0, keepdims=True))   # (K, N)

    denom = jnp.sum(s, axis=1, keepdims=True)         # (K, 1)

    # sx[k, c] = sum_n s[k, n] * x[c, n]   (contract over N)
    sx = lax.dot_general(
        s, x_cn, (((1,), (1,)), ((), ())),
        preferred_element_type=jnp.float32)           # (K, C)

    nodes = inv * (sx - denom * a) * pl.reciprocal(denom + 1e-7)   # (K, C)

    # F.normalize(p=2, dim=2): per-node L2 over channels, eps=1e-12
    row_ssq = jnp.sum(nodes * nodes, axis=1, keepdims=True)        # (K, 1)
    nodes = nodes * lax.rsqrt(jnp.maximum(row_ssq, 1e-24))

    # F.normalize over the flattened (K*C) vector, eps=1e-12
    all_ssq = jnp.sum(nodes * nodes)
    nodes = nodes * lax.rsqrt(jnp.maximum(all_ssq, 1e-24))

    nodes_ref[0] = nodes                               # (K, C)
    sa_ref[0] = s                                      # (K, N) — no transpose


def graphnet_forward(x_nchw, anchor, sigma_param):
    """x_nchw: (B, C, H, W) float32; anchor/sigma_param: (K, C) float32."""
    B, C, H, W = x_nchw.shape
    K, Cd = anchor.shape
    assert Cd == C
    N = H * W

    # Native layout: (B, C, N) — no transpose / extra HBM pass over x.
    x_bcn = x_nchw.reshape(B, C, N).astype(jnp.float32)

    # Batch-invariant parameter math hoisted out of the kernel.
    anchor_f = anchor.astype(jnp.float32)
    sig = jax.nn.sigmoid(sigma_param.astype(jnp.float32))
    inv = 1.0 / (sig + 1e-7)                           # (K, C)
    w = inv * inv                                      # (K, C)
    aw2 = -2.0 * anchor_f * w                          # (K, C)
    const = jnp.sum(anchor_f * anchor_f * w, axis=1, keepdims=True)  # (K, 1)

    nodes_bkc, soft_assign = pl.pallas_call(
        _graphnet_kernel,
        out_shape=(
            jax.ShapeDtypeStruct((B, K, C), jnp.float32),
            jax.ShapeDtypeStruct((B, K, N), jnp.float32),
        ),
        grid_spec=pltpu.PrefetchScalarGridSpec(
            num_scalar_prefetch=0,
            grid=(B,),
            in_specs=[
                pl.BlockSpec((1, C, N), lambda b: (b, 0, 0)),
                pl.BlockSpec((K, C), lambda b: (0, 0)),
                pl.BlockSpec((K, C), lambda b: (0, 0)),
                pl.BlockSpec((K, C), lambda b: (0, 0)),
                pl.BlockSpec((K, C), lambda b: (0, 0)),
                pl.BlockSpec((K, 1), lambda b: (0, 0)),
            ],
            out_specs=[
                pl.BlockSpec((1, K, C), lambda b: (b, 0, 0)),
                pl.BlockSpec((1, K, N), lambda b: (b, 0, 0)),
            ],
        ),
        # Batch axis parallel: on v7x the two batch elements land on the two
        # TensorCores; on v5e/v6e it is a cheap 2-step serial loop.
        compiler_params=pltpu.CompilerParams(
            dimension_semantics=("parallel",)),
    )(x_bcn, w, aw2, inv, anchor_f, const)

    # PyTorch: nodes.view(B, -1) then .view(B, C, node_num) on a contiguous
    # (B, K, C) buffer — a raw row-major reinterpretation. Reproduce it.
    nodes_bck = nodes_bkc.reshape(B, K * C).reshape(B, C, K)
    return nodes_bck, soft_assign


def _reference_forward(x_nchw, anchor, sigma_param):
    """Pure-JAX reference mirroring the PyTorch module (for verification)."""
    B, C, H, W = x_nchw.shape
    K = anchor.shape[0]
    N = H * W
    sigma = jax.nn.sigmoid(sigma_param)
    x_bnc = jnp.transpose(x_nchw.reshape(B, C, N), (0, 2, 1))      # (B, N, C)
    residual = (x_bnc[:, None, :, :] - anchor[None, :, None, :]) / (
        sigma[None, :, None, :] + 1e-7)                            # (B,K,N,C)
    residual_pow = -jnp.sum(residual ** 2, axis=3) / 2.0           # (B,K,N)
    soft_assign = jax.nn.softmax(residual_pow, axis=1)             # (B,K,N)
    numerator = jnp.sum(residual * soft_assign[..., None], axis=2) # (B,K,C)
    denominator = jnp.sum(soft_assign, axis=2)[..., None]          # (B,K,1)
    nodes = numerator / (denominator + 1e-7)
    nodes = nodes / jnp.maximum(
        jnp.linalg.norm(nodes, axis=2, keepdims=True), 1e-12)
    flat = nodes.reshape(B, -1)
    flat = flat / jnp.maximum(
        jnp.linalg.norm(flat, axis=1, keepdims=True), 1e-12)
    return flat.reshape(B, C, K), soft_assign


if __name__ == "__main__":
    B, C, H, W = 2, 32, 16, 16       # dim = C = 32
    K = 8                            # node_num = 8

    key = jax.random.PRNGKey(0)
    kx, ka, ks = jax.random.split(key, 3)
    x = jax.random.normal(kx, (B, C, H, W), dtype=jnp.float32)
    # torch.rand -> uniform [0, 1)
    anchor = jax.random.uniform(ka, (K, C), dtype=jnp.float32)
    sigma_param = jax.random.uniform(ks, (K, C), dtype=jnp.float32)

    nodes, soft_assign = graphnet_forward(x, anchor, sigma_param)
    nodes = jax.block_until_ready(nodes)
    soft_assign = jax.block_until_ready(soft_assign)

    nodes_ref, sa_ref = _reference_forward(x, anchor, sigma_param)
    assert nodes.shape == (B, C, K)
    assert soft_assign.shape == (B, K, H * W)
    assert jnp.allclose(nodes, nodes_ref, atol=1e-4, rtol=1e-4)
    assert jnp.allclose(soft_assign, sa_ref, atol=1e-4, rtol=1e-4)

    print("KERNEL_OK")
</pallas_src>

<mosaic_0001>
module attributes {stable_mosaic.version = 11 : i64} {
  func.func @_graphnet_kernel(%arg0: i32, %arg1: memref<1x32x256xf32, #tpu.memory_space<vmem>>, %arg2: memref<8x32xf32, #tpu.memory_space<vmem>>, %arg3: memref<8x32xf32, #tpu.memory_space<vmem>>, %arg4: memref<8x32xf32, #tpu.memory_space<vmem>>, %arg5: memref<8x32xf32, #tpu.memory_space<vmem>>, %arg6: memref<8x1xf32, #tpu.memory_space<vmem>>, %arg7: memref<1x8x32xf32, #tpu.memory_space<vmem>>, %arg8: memref<1x8x256xf32, #tpu.memory_space<vmem>>) attributes {dimension_semantics = [#tpu.dimension_semantics<parallel>], iteration_bounds = array<i64: 2>, scalar_prefetch = 0 : i64, scratch_operands = 0 : i64, tpu.core_type = #tpu.core_type<tc>, window_params = [{transform_indices = @transform_0, window_bounds = array<i64: 1, 32, 256>}, {pipeline_mode = #tpu.pipeline_mode<synchronous>, transform_indices = @transform_1, window_bounds = array<i64: 8, 32>}, {pipeline_mode = #tpu.pipeline_mode<synchronous>, transform_indices = @transform_2, window_bounds = array<i64: 8, 32>}, {pipeline_mode = #tpu.pipeline_mode<synchronous>, transform_indices = @transform_3, window_bounds = array<i64: 8, 32>}, {pipeline_mode = #tpu.pipeline_mode<synchronous>, transform_indices = @transform_4, window_bounds = array<i64: 8, 32>}, {pipeline_mode = #tpu.pipeline_mode<synchronous>, transform_indices = @transform_5, window_bounds = array<i64: 8, 1>}, {transform_indices = @transform_6, window_bounds = array<i64: 1, 8, 32>}, {transform_indices = @transform_7, window_bounds = array<i64: 1, 8, 256>}]} {
    %c0 = arith.constant 0 : index
    %c0_0 = arith.constant 0 : index
    %c0_1 = arith.constant 0 : index
    %0 = vector.load %arg1[%c0, %c0_0, %c0_1] : memref<1x32x256xf32, #tpu.memory_space<vmem>>, vector<1x32x256xf32>
    %1 = vector.shape_cast %0 : vector<1x32x256xf32> to vector<32x256xf32>
    %c0_2 = arith.constant 0 : index
    %c0_3 = arith.constant 0 : index
    %2 = vector.load %arg2[%c0_2, %c0_3] : memref<8x32xf32, #tpu.memory_space<vmem>>, vector<8x32xf32>
    %c0_4 = arith.constant 0 : index
    %c0_5 = arith.constant 0 : index
    %3 = vector.load %arg3[%c0_4, %c0_5] : memref<8x32xf32, #tpu.memory_space<vmem>>, vector<8x32xf32>
    %c0_6 = arith.constant 0 : index
    %c0_7 = arith.constant 0 : index
    %4 = vector.load %arg4[%c0_6, %c0_7] : memref<8x32xf32, #tpu.memory_space<vmem>>, vector<8x32xf32>
    %c0_8 = arith.constant 0 : index
    %c0_9 = arith.constant 0 : index
    %5 = vector.load %arg5[%c0_8, %c0_9] : memref<8x32xf32, #tpu.memory_space<vmem>>, vector<8x32xf32>
    %c0_10 = arith.constant 0 : index
    %c0_11 = arith.constant 0 : index
    %6 = vector.load %arg6[%c0_10, %c0_11] : memref<8x1xf32, #tpu.memory_space<vmem>>, vector<8x1xf32>
    %7 = arith.mulf %1, %1 : vector<32x256xf32>
    %cst = arith.constant dense<0.000000e+00> : vector<8x256xf32>
    %8 = tpu.matmul %2, %7, %cst {dimension_numbers = #tpu.dot_dimension_numbers<[1], [0], [0], [1], [0, 0, 1, 1], [], []>} : vector<8x32xf32>, vector<32x256xf32>, vector<8x256xf32> -> vector<8x256xf32>
    %cst_12 = arith.constant dense<0.000000e+00> : vector<8x256xf32>
    %9 = tpu.matmul %3, %1, %cst_12 {dimension_numbers = #tpu.dot_dimension_numbers<[1], [0], [0], [1], [0, 0, 1, 1], [], []>} : vector<8x32xf32>, vector<32x256xf32>, vector<8x256xf32> -> vector<8x256xf32>
    %10 = arith.addf %8, %9 : vector<8x256xf32>
    %11 = vector.broadcast %6 : vector<8x1xf32> to vector<8x256xf32>
    %12 = arith.addf %10, %11 : vector<8x256xf32>
    %cst_13 = arith.constant -5.000000e-01 : f32
    %13 = vector.broadcast %cst_13 : f32 to vector<8x256xf32>
    %14 = arith.mulf %13, %12 : vector<8x256xf32>
    %cst_14 = arith.constant dense<0xFF800000> : vector<256xf32>
    %15 = vector.multi_reduction <maximumf>, %14, %cst_14 [0] : vector<8x256xf32> to vector<256xf32>
    %16 = vector.shape_cast %15 : vector<256xf32> to vector<1x256xf32>
    %17 = vector.broadcast %16 : vector<1x256xf32> to vector<8x256xf32>
    %18 = arith.subf %14, %17 : vector<8x256xf32>
    %19 = math.exp %18 : vector<8x256xf32>
    %cst_15 = arith.constant dense<0.000000e+00> : vector<256xf32>
    %20 = vector.multi_reduction <add>, %19, %cst_15 [0] : vector<8x256xf32> to vector<256xf32>
    %21 = vector.shape_cast %20 : vector<256xf32> to vector<1x256xf32>
    %22 = tpu.reciprocal %21 : vector<1x256xf32> -> vector<1x256xf32>
    %23 = vector.broadcast %22 : vector<1x256xf32> to vector<8x256xf32>
    %24 = arith.mulf %19, %23 : vector<8x256xf32>
    %cst_16 = arith.constant dense<0.000000e+00> : vector<8xf32>
    %25 = vector.multi_reduction <add>, %24, %cst_16 [1] : vector<8x256xf32> to vector<8xf32>
    %26 = vector.shape_cast %25 : vector<8xf32> to vector<8x1xf32>
    %cst_17 = arith.constant dense<0.000000e+00> : vector<8x32xf32>
    %27 = tpu.matmul %24, %1, %cst_17 {dimension_numbers = #tpu.dot_dimension_numbers<[1], [1], [0], [0], [0, 0, 1, 0], [], []>} : vector<8x256xf32>, vector<32x256xf32>, vector<8x32xf32> -> vector<8x32xf32>
    %28 = vector.broadcast %26 : vector<8x1xf32> to vector<8x32xf32>
    %29 = arith.mulf %28, %5 : vector<8x32xf32>
    %30 = arith.subf %27, %29 : vector<8x32xf32>
    %31 = arith.mulf %4, %30 : vector<8x32xf32>
    %cst_18 = arith.constant 1.000000e-07 : f32
    %32 = vector.broadcast %cst_18 : f32 to vector<8x1xf32>
    %33 = arith.addf %26, %32 : vector<8x1xf32>
    %34 = tpu.reciprocal %33 : vector<8x1xf32> -> vector<8x1xf32>
    %35 = vector.broadcast %34 : vector<8x1xf32> to vector<8x32xf32>
    %36 = arith.mulf %31, %35 : vector<8x32xf32>
    %37 = arith.mulf %36, %36 : vector<8x32xf32>
    %cst_19 = arith.constant dense<0.000000e+00> : vector<8xf32>
    %38 = vector.multi_reduction <add>, %37, %cst_19 [1] : vector<8x32xf32> to vector<8xf32>
    %39 = vector.shape_cast %38 : vector<8xf32> to vector<8x1xf32>
    %cst_20 = arith.constant 1.000000e-24 : f32
    %40 = vector.broadcast %cst_20 : f32 to vector<8x1xf32>
    %41 = arith.maximumf %39, %40 : vector<8x1xf32>
    %42 = math.rsqrt %41 : vector<8x1xf32>
    %43 = vector.broadcast %42 : vector<8x1xf32> to vector<8x32xf32>
    %44 = arith.mulf %36, %43 : vector<8x32xf32>
    %45 = arith.mulf %44, %44 : vector<8x32xf32>
    %46 = vector.shape_cast %45 : vector<8x32xf32> to vector<1x8x32xf32>
    %cst_21 = arith.constant dense<0.000000e+00> : vector<1xf32>
    %47 = vector.multi_reduction <add>, %46, %cst_21 [1, 2] : vector<1x8x32xf32> to vector<1xf32>
    %48 = vector.shape_cast %47 : vector<1xf32> to vector<1x1x1xf32>
    %49 = vector.extract %48[0, 0, 0] : f32 from vector<1x1x1xf32>
    %cst_22 = arith.constant 1.000000e-24 : f32
    %50 = arith.maximumf %49, %cst_22 : f32
    %51 = math.rsqrt %50 : f32
    %52 = vector.broadcast %51 : f32 to vector<8x32xf32>
    %53 = arith.mulf %44, %52 : vector<8x32xf32>
    %c0_23 = arith.constant 0 : index
    %c0_24 = arith.constant 0 : index
    %c0_25 = arith.constant 0 : index
    %54 = vector.load %arg7[%c0_23, %c0_24, %c0_25] : memref<1x8x32xf32, #tpu.memory_space<vmem>>, vector<1x8x32xf32>
    %55 = vector.shape_cast %54 : vector<1x8x32xf32> to vector<8x32xf32>
    %56 = vector.shape_cast %53 : vector<8x32xf32> to vector<1x8x32xf32>
    tpu.vector_store %arg7[%c0_23, %c0_24, %c0_25], %56 {strides = array<i32>} : memref<1x8x32xf32, #tpu.memory_space<vmem>>, vector<1x8x32xf32>,
    %c0_26 = arith.constant 0 : index
    %c0_27 = arith.constant 0 : index
    %c0_28 = arith.constant 0 : index
    %57 = vector.load %arg8[%c0_26, %c0_27, %c0_28] : memref<1x8x256xf32, #tpu.memory_space<vmem>>, vector<1x8x256xf32>
    %58 = vector.shape_cast %57 : vector<1x8x256xf32> to vector<8x256xf32>
    %59 = vector.shape_cast %24 : vector<8x256xf32> to vector<1x8x256xf32>
    tpu.vector_store %arg8[%c0_26, %c0_27, %c0_28], %59 {strides = array<i32>} : memref<1x8x256xf32, #tpu.memory_space<vmem>>, vector<1x8x256xf32>,
    return
  }
  func.func @transform_0(%arg0: i32) -> (i32, i32, i32) {
    %c0_i32 = arith.constant 0 : i32
    %c0_i32_0 = arith.constant 0 : i32
    %c0_i32_1 = arith.constant 0 : i32
    return %arg0, %c0_i32, %c0_i32_0 : i32, i32, i32
  }
  func.func @transform_1(%arg0: i32) -> (i32, i32) {
    %c0_i32 = arith.constant 0 : i32
    %c0_i32_0 = arith.constant 0 : i32
    %c0_i32_1 = arith.constant 0 : i32
    return %c0_i32, %c0_i32_0 : i32, i32
  }
  func.func @transform_2(%arg0: i32) -> (i32, i32) {
    %c0_i32 = arith.constant 0 : i32
    %c0_i32_0 = arith.constant 0 : i32
    %c0_i32_1 = arith.constant 0 : i32
    return %c0_i32, %c0_i32_0 : i32, i32
  }
  func.func @transform_3(%arg0: i32) -> (i32, i32) {
    %c0_i32 = arith.constant 0 : i32
    %c0_i32_0 = arith.constant 0 : i32
    %c0_i32_1 = arith.constant 0 : i32
    return %c0_i32, %c0_i32_0 : i32, i32
  }
  func.func @transform_4(%arg0: i32) -> (i32, i32) {
    %c0_i32 = arith.constant 0 : i32
    %c0_i32_0 = arith.constant 0 : i32
    %c0_i32_1 = arith.constant 0 : i32
    return %c0_i32, %c0_i32_0 : i32, i32
  }
  func.func @transform_5(%arg0: i32) -> (i32, i32) {
    %c0_i32 = arith.constant 0 : i32
    %c0_i32_0 = arith.constant 0 : i32
    %c0_i32_1 = arith.constant 0 : i32
    return %c0_i32, %c0_i32_0 : i32, i32
  }
  func.func @transform_6(%arg0: i32) -> (i32, i32, i32) {
    %c0_i32 = arith.constant 0 : i32
    %c0_i32_0 = arith.constant 0 : i32
    %c0_i32_1 = arith.constant 0 : i32
    return %arg0, %c0_i32, %c0_i32_0 : i32, i32, i32
  }
  func.func @transform_7(%arg0: i32) -> (i32, i32, i32) {
    %c0_i32 = arith.constant 0 : i32
    %c0_i32_0 = arith.constant 0 : i32
    %c0_i32_1 = arith.constant 0 : i32
    return %arg0, %c0_i32, %c0_i32_0 : i32, i32, i32
  }
}

</mosaic_0001>

<llo_original>
// kernel: tpu_custom_call.1
$region0: #{tpu_custom_call.1}
  #allocation0 [shape = 'u32[]', space=smem, size = 0x4, offset = 0x4, fixed_abs, tag = 'smem constant byte address 0x4 - core index']
  #allocation1 [shape = 'u32[72,128]{1,0:T(1,128)}', space=vmem, size = 0x9000, scoped, tag = 'internal scratch']
  %s0 = inlined_call_operand.hbm [shape: f32[2,32,256], index: 0, kind: input, shape index: {}]
  %s1 = inlined_call_operand.vmem [shape: f32[8,32], index: 1, kind: input, shape index: {}]
  %s2 = inlined_call_operand.hbm [shape: f32[8,32], index: 2, kind: input, shape index: {}]
  %s3 = inlined_call_operand.hbm [shape: f32[8,32], index: 3, kind: input, shape index: {}]
  %s4 = inlined_call_operand.hbm [shape: f32[8,32], index: 4, kind: input, shape index: {}]
  %s5 = inlined_call_operand.vmem [shape: f32[8,1], index: 5, kind: input, shape index: {}]
  %s6 = inlined_call_operand.hbm [shape: f32[2,8,32], index: 6, kind: output, shape index: {0}]
  %s7 = inlined_call_operand.hbm [shape: f32[2,8,256], index: 7, kind: output, shape index: {1}]
  %8 = xla_tuple %s6, %s7
  %s9 = sld [smem:[#allocation0]]
  $region81: #{tpu_custom_call.1} parent=0
    _
  %s11 = ssub.s32 1, %s9
  %s12 = scalar_select 0, %s11, %s9
  $region1: #{tpu_custom_call.1} parent=0
    #allocation2 [shape = 'u8[65536]{0}', space=vmem, size = 0x10000, scoped, tag = 'input window, operand 0']
    #allocation3 [shape = 's32[2]{0}', space=sflag, size = 0x8, scoped, tag = 'scoped memory for tpu_custom_call.1']
    #allocation4 [shape = 's32[2]{0}', space=sflag, size = 0x8, scoped, tag = 'scoped memory for tpu_custom_call.1']
    #allocation5 [shape = 'u8[4096]{0}', space=vmem, size = 0x1000, scoped, tag = 'input window, operand 2, single buffered']
    #allocation6 [shape = 's32[1]{0}', space=sflag, size = 0x4, scoped, tag = 'scoped memory for tpu_custom_call.1']
    #allocation7 [shape = 'u8[4096]{0}', space=vmem, size = 0x1000, scoped, tag = 'input window, operand 3, single buffered']
    #allocation8 [shape = 'u8[4096]{0}', space=vmem, size = 0x1000, scoped, tag = 'input window, operand 4, single buffered']
    #allocation9 [shape = 's32[1]{0}', space=sflag, size = 0x4, scoped, tag = 'scoped memory for tpu_custom_call.1']
    #allocation10 [shape = 'u8[8192]{0}', space=vmem, size = 0x2000, scoped, tag = 'output window, operand 0']
    #allocation11 [shape = 'u8[16384]{0}', space=vmem, size = 0x4000, scoped, tag = 'output window, operand 1']
    #allocation12 [shape = 's32[2]{0}', space=sflag, size = 0x8, scoped, tag = 'scoped memory for tpu_custom_call.1']
    %13 = vsyncpa [#allocation3], 0
    %s14 = scalar_lea.sflag [#allocation3], 1
    %15 = vsyncpa %s14, 0
    %16 = vsyncpa [#allocation6], 0
    %17 = vsyncpa [#allocation9], 0
    %18 = vsyncpa [#allocation4], 0
    %s19 = scalar_lea.sflag [#allocation4], 1
    %20 = vsyncpa %s19, 0
    %21 = vsyncpa [#allocation12], 0
    %s22 = scalar_lea.sflag [#allocation12], 1
    %23 = vsyncpa %s22, 0
    loop: start=0, step=1, limit=4
    $region2: #{tpu_custom_call.1} parent=1 // loop_pre_header
      _
    $region3: #{tpu_custom_call.1} parent=1 // loop_header
      %s25 = sphi 0, %s29
      %p26 = scmp.ge.s32.totalorder %s25, 4
      %s35 = sphi 0, %s37
      %s38 = sphi 0, %s35
      %s39 = sphi 0, %s38
      %s55 = sphi 0, %s39
      %s59 = sphi 0, %s59
      %s61 = sphi 0, %s59
      %s62 = sphi 0, %s61
      %s76 = sphi 0, %s62
      %s80 = sphi 0, %s80
      %s82 = sphi 0, %s80
      %s83 = sphi 0, %s82
      %s97 = sphi 0, %s83
      %s101 = sphi 0, %s101
      %s103 = sphi 0, %s101
      %s104 = sphi 0, %s103
      %s118 = sphi 0, %s104
      %s122 = sphi 0, %s122
      %s124 = sphi 0, %s122
      %s125 = sphi 0, %s124
      %s139 = sphi 0, %s125
      %s143 = sphi 0, %s143
      %s145 = sphi 0, %s143
      %s146 = sphi 0, %s145
      %s160 = sphi 0, %s146
      %s166 = sphi 0, %s168
      %s169 = sphi 0, %s166
      %s170 = sphi 0, %s169
      %s186 = sphi 0, %s170
      %s192 = sphi 0, %s194
      %s195 = sphi 0, %s192
      %s196 = sphi 0, %s195
      %s212 = sphi 0, %s196
    $region4: #{tpu_custom_call.1} parent=1 // loop_header_branch
      %28 = sbr.rel (%p26) target = $region8
    $region5: #{tpu_custom_call.1} parent=1 // loop_body
      %s30 = ssub.s32 %s25, 1
      %s31 = ssub.s32 %s25, 2
      %s32 = sadd.s32 %s25, 1
      %s33 = ssub.s32 %s25, %s32
      %p34 = scmp.eq.s32.totalorder %s33, 0
      %s36 = sadd.s32 %s35, 1
      %s37 = scalar_select %p34, %s35, %s36
      %p40 = pneg %p34
      %p41 = scmp.eq.s32.totalorder %s25, 1
      %p42 = por %p40, %p41
      %p43 = scmp.ne.s32.totalorder %s35, %s38
      %p44 = scmp.eq.s32.totalorder %s25, 0
      %p45 = por %p43, %p44
      %p46 = scmp.ne.s32.totalorder %s35, %s38
      %p47 = scmp.eq.s32.totalorder %s30, 1
      %p48 = por %p46, %p47
      %p49 = scmp.ne.s32.totalorder %s38, %s39
      %p50 = scmp.eq.s32.totalorder %s30, 0
      %p51 = por %p49, %p50
      %p52 = scmp.ne.s32.totalorder %s38, %s39
      %p53 = scmp.eq.s32.totalorder %s31, 1
      %p54 = por %p52, %p53
      %p56 = scmp.ne.s32.totalorder %s39, %s55
      %p57 = scmp.eq.s32.totalorder %s31, 0
      %p58 = por %p56, %p57
      %s60 = sadd.s32 %s59, 1
      %p63 = scmp.eq.s32.totalorder %s25, 1
      %p64 = scmp.ne.s32.totalorder %s59, %s61
      %p65 = scmp.eq.s32.totalorder %s25, 0
      %p66 = por %p64, %p65
      %p67 = scmp.ne.s32.totalorder %s59, %s61
      %p68 = scmp.eq.s32.totalorder %s30, 1
      %p69 = por %p67, %p68
      %p70 = scmp.ne.s32.totalorder %s61, %s62
      %p71 = scmp.eq.s32.totalorder %s30, 0
      %p72 = por %p70, %p71
      %p73 = scmp.ne.s32.totalorder %s61, %s62
      %p74 = scmp.eq.s32.totalorder %s31, 1
      %p75 = por %p73, %p74
      %p77 = scmp.ne.s32.totalorder %s62, %s76
      %p78 = scmp.eq.s32.totalorder %s31, 0
      %p79 = por %p77, %p78
      %s81 = sadd.s32 %s80, 1
      %p84 = scmp.eq.s32.totalorder %s25, 1
      %p85 = scmp.ne.s32.totalorder %s80, %s82
      %p86 = scmp.eq.s32.totalorder %s25, 0
      %p87 = por %p85, %p86
      %p88 = scmp.ne.s32.totalorder %s80, %s82
      %p89 = scmp.eq.s32.totalorder %s30, 1
      %p90 = por %p88, %p89
      %p91 = scmp.ne.s32.totalorder %s82, %s83
      %p92 = scmp.eq.s32.totalorder %s30, 0
      %p93 = por %p91, %p92
      %p94 = scmp.ne.s32.totalorder %s82, %s83
      %p95 = scmp.eq.s32.totalorder %s31, 1
      %p96 = por %p94, %p95
      %p98 = scmp.ne.s32.totalorder %s83, %s97
      %p99 = scmp.eq.s32.totalorder %s31, 0
      %p100 = por %p98, %p99
      %s102 = sadd.s32 %s101, 1
      %p105 = scmp.eq.s32.totalorder %s25, 1
      %p106 = scmp.ne.s32.totalorder %s101, %s103
      %p107 = scmp.eq.s32.totalorder %s25, 0
      %p108 = por %p106, %p107
      %p109 = scmp.ne.s32.totalorder %s101, %s103
      %p110 = scmp.eq.s32.totalorder %s30, 1
      %p111 = por %p109, %p110
      %p112 = scmp.ne.s32.totalorder %s103, %s104
      %p113 = scmp.eq.s32.totalorder %s30, 0
      %p114 = por %p112, %p113
      %p115 = scmp.ne.s32.totalorder %s103, %s104
      %p116 = scmp.eq.s32.totalorder %s31, 1
      %p117 = por %p115, %p116
      %p119 = scmp.ne.s32.totalorder %s104, %s118
      %p120 = scmp.eq.s32.totalorder %s31, 0
      %p121 = por %p119, %p120
      %s123 = sadd.s32 %s122, 1
      %p126 = scmp.eq.s32.totalorder %s25, 1
      %p127 = scmp.ne.s32.totalorder %s122, %s124
      %p128 = scmp.eq.s32.totalorder %s25, 0
      %p129 = por %p127, %p128
      %p130 = scmp.ne.s32.totalorder %s122, %s124
      %p131 = scmp.eq.s32.totalorder %s30, 1
      %p132 = por %p130, %p131
      %p133 = scmp.ne.s32.totalorder %s124, %s125
      %p134 = scmp.eq.s32.totalorder %s30, 0
      %p135 = por %p133, %p134
      %p136 = scmp.ne.s32.totalorder %s124, %s125
      %p137 = scmp.eq.s32.totalorder %s31, 1
      %p138 = por %p136, %p137
      %p140 = scmp.ne.s32.totalorder %s125, %s139
      %p141 = scmp.eq.s32.totalorder %s31, 0
      %p142 = por %p140, %p141
      %s144 = sadd.s32 %s143, 1
      %p147 = scmp.eq.s32.totalorder %s25, 1
      %p148 = scmp.ne.s32.totalorder %s143, %s145
      %p149 = scmp.eq.s32.totalorder %s25, 0
      %p150 = por %p148, %p149
      %p151 = scmp.ne.s32.totalorder %s143, %s145
      %p152 = scmp.eq.s32.totalorder %s30, 1
      %p153 = por %p151, %p152
      %p154 = scmp.ne.s32.totalorder %s145, %s146
      %p155 = scmp.eq.s32.totalorder %s30, 0
      %p156 = por %p154, %p155
      %p157 = scmp.ne.s32.totalorder %s145, %s146
      %p158 = scmp.eq.s32.totalorder %s31, 1
      %p159 = por %p157, %p158
      %p161 = scmp.ne.s32.totalorder %s146, %s160
      %p162 = scmp.eq.s32.totalorder %s31, 0
      %p163 = por %p161, %p162
      %s164 = ssub.s32 %s25, %s32
      %p165 = scmp.eq.s32.totalorder %s164, 0
      %s167 = sadd.s32 %s166, 1
      %s168 = scalar_select %p165, %s166, %s167
      %p171 = pneg %p165
      %p172 = scmp.eq.s32.totalorder %s25, 1
      %p173 = por %p171, %p172
      %p174 = scmp.ne.s32.totalorder %s166, %s169
      %p175 = scmp.eq.s32.totalorder %s25, 0
      %p176 = por %p174, %p175
      %p177 = scmp.ne.s32.totalorder %s166, %s169
      %p178 = scmp.eq.s32.totalorder %s30, 1
      %p179 = por %p177, %p178
      %p180 = scmp.ne.s32.totalorder %s169, %s170
      %p181 = scmp.eq.s32.totalorder %s30, 0
      %p182 = por %p180, %p181
      %p183 = scmp.ne.s32.totalorder %s169, %s170
      %p184 = scmp.eq.s32.totalorder %s31, 1
      %p185 = por %p183, %p184
      %p187 = scmp.ne.s32.totalorder %s170, %s186
      %p188 = scmp.eq.s32.totalorder %s31, 0
      %p189 = por %p187, %p188
      %s190 = ssub.s32 %s25, %s32
      %p191 = scmp.eq.s32.totalorder %s190, 0
      %s193 = sadd.s32 %s192, 1
      %s194 = scalar_select %p191, %s192, %s193
      %p197 = pneg %p191
      %p198 = scmp.eq.s32.totalorder %s25, 1
      %p199 = por %p197, %p198
      %p200 = scmp.ne.s32.totalorder %s192, %s195
      %p201 = scmp.eq.s32.totalorder %s25, 0
      %p202 = por %p200, %p201
      %p203 = scmp.ne.s32.totalorder %s192, %s195
      %p204 = scmp.eq.s32.totalorder %s30, 1
      %p205 = por %p203, %p204
      %p206 = scmp.ne.s32.totalorder %s195, %s196
      %p207 = scmp.eq.s32.totalorder %s30, 0
      %p208 = por %p206, %p207
      %p209 = scmp.ne.s32.totalorder %s195, %s196
      %p210 = scmp.eq.s32.totalorder %s31, 1
      %p211 = por %p209, %p210
      %p213 = scmp.ne.s32.totalorder %s196, %s212
      %p214 = scmp.eq.s32.totalorder %s31, 0
      %p215 = por %p213, %p214
      %p216 = scmp.le.s32.totalorder 1, %s25
      %p217 = scmp.lt.s32.totalorder %s25, 3
      %p218 = pnand %p216, %p217
      %p219 = pneg %p218
      // Predicated region
      $region9: #{tpu_custom_call.1} parent=5 // pred_check
        _
      $region10: #{tpu_custom_call.1} parent=5 // pred_check_branch
        %221 = sbr.rel (%p218) target = $region12
      $region11: #{tpu_custom_call.1} parent=5 // pred_region
        %s222 = ssub.s32 %s25, 1
        // Predicated region
        $region13: #{tpu_custom_call.1} parent=11 // pred_check
          %p223 = pneg %p72
        $region14: #{tpu_custom_call.1} parent=11 // pred_check_branch
          %225 = sbr.rel (%p223) target = $region16
        $region15: #{tpu_custom_call.1} parent=11 // pred_region
          _
        $region16: #{tpu_custom_call.1} parent=11 // pred_fallthru
          _
        // Predicated region
        $region17: #{tpu_custom_call.1} parent=11 // pred_check
          %p226 = pneg %p93
        $region18: #{tpu_custom_call.1} parent=11 // pred_check_branch
          %228 = sbr.rel (%p226) target = $region20
        $region19: #{tpu_custom_call.1} parent=11 // pred_region
          %230 = vsyncadd [#allocation6], 0
          %s232 = sshll.u32 %s2, 4
          %s233 = int_to_ptr.hbm [resolvable:$true] %s232
          %s234 = sshll.u32 [#allocation5], 4
          %s235 = int_to_ptr.vmem [resolvable:$true] %s234
          %237 = dma.hbm_to_vmem [thread:$0]  %s233, 128, %s235, [#allocation6]
        $region20: #{tpu_custom_call.1} parent=11 // pred_fallthru
          _
        // Predicated region
        $region21: #{tpu_custom_call.1} parent=11 // pred_check
          %p238 = pneg %p114
        $region22: #{tpu_custom_call.1} parent=11 // pred_check_branch
          %240 = sbr.rel (%p238) target = $region24
        $region23: #{tpu_custom_call.1} parent=11 // pred_region
          %242 = vsyncadd [#allocation6], 0
          %s244 = sshll.u32 %s3, 4
          %s245 = int_to_ptr.hbm [resolvable:$true] %s244
          %s246 = sshll.u32 [#allocation7], 4
          %s247 = int_to_ptr.vmem [resolvable:$true] %s246
          %249 = dma.hbm_to_vmem [thread:$0]  %s245, 128, %s247, [#allocation6]
        $region24: #{tpu_custom_call.1} parent=11 // pred_fallthru
          _
        // Predicated region
        $region25: #{tpu_custom_call.1} parent=11 // pred_check
          %p250 = pneg %p135
        $region26: #{tpu_custom_call.1} parent=11 // pred_check_branch
          %252 = sbr.rel (%p250) target = $region28
        $region27: #{tpu_custom_call.1} parent=11 // pred_region
          %254 = vsyncadd [#allocation9], 0
          %s256 = sshll.u32 %s4, 4
          %s257 = int_to_ptr.hbm [resolvable:$true] %s256
          %s258 = sshll.u32 [#allocation8], 4
          %s259 = int_to_ptr.vmem [resolvable:$true] %s258
          %261 = dma.hbm_to_vmem [thread:$0]  %s257, 128, %s259, [#allocation9]
        $region28: #{tpu_custom_call.1} parent=11 // pred_fallthru
          _
        // Predicated region
        $region29: #{tpu_custom_call.1} parent=11 // pred_check
          %p262 = pneg %p156
        $region30: #{tpu_custom_call.1} parent=11 // pred_check_branch
          %264 = sbr.rel (%p262) target = $region32
        $region31: #{tpu_custom_call.1} parent=11 // pred_region
          _
        $region32: #{tpu_custom_call.1} parent=11 // pred_fallthru
          _
      $region12: #{tpu_custom_call.1} parent=5 // pred_fallthru
        _
      %p265 = scmp.lt.s32.totalorder %s25, 2
      // Predicated region
      $region33: #{tpu_custom_call.1} parent=5 // pred_check
        %p266 = pneg %p265
      $region34: #{tpu_custom_call.1} parent=5 // pred_check_branch
        %268 = sbr.rel (%p266) target = $region36
      $region35: #{tpu_custom_call.1} parent=5 // pred_region
        // Predicated region
        $region37: #{tpu_custom_call.1} parent=35 // pred_check
          %p269 = pneg %p45
        $region38: #{tpu_custom_call.1} parent=35 // pred_check_branch
          %271 = sbr.rel (%p269) target = $region40
        $region39: #{tpu_custom_call.1} parent=35 // pred_region
          %s272 = sand.u32 %s35, 1
          %s273 = scalar_lea.sflag [#allocation3], %s272
          %s274 = sand.u32 %s35, 1
          %s275 = smul.addr %s274, 64
          %s276 = scalar_lea.vmem [#allocation2], %s275
          %278 = vsyncadd %s273, 0
          %s279 = smul.addr %s25, 8
          %s280 = smul.addr %s279, 8
          %s281 = scalar_lea.hbm %s0, %s280
          %s282 = sshll.u32 %s281, 4
          %s283 = int_to_ptr.hbm [resolvable:$true] %s282
          %s284 = sshll.u32 %s276, 4
          %s285 = int_to_ptr.vmem [resolvable:$true] %s284
          %290 = dma.hbm_to_vmem [thread:$0]  %s283, 1024, %s285, %s273, 256, 256, 16
        $region40: #{tpu_custom_call.1} parent=35 // pred_fallthru
          _
      $region36: #{tpu_custom_call.1} parent=5 // pred_fallthru
        _
      %p291 = scmp.le.s32.totalorder 1, %s25
      %p292 = scmp.lt.s32.totalorder %s25, 3
      %p293 = pnand %p291, %p292
      %p294 = pneg %p293
      // Predicated region
      $region41: #{tpu_custom_call.1} parent=5 // pred_check
        _
      $region42: #{tpu_custom_call.1} parent=5 // pred_check_branch
        %296 = sbr.rel (%p293) target = $region44
      $region43: #{tpu_custom_call.1} parent=5 // pred_region
        %s297 = ssub.s32 %s25, 1
        %s298 = sand.u32 %s38, 1
        %s299 = scalar_lea.sflag [#allocation3], %s298
        %s300 = sand.u32 %s38, 1
        %s301 = smul.addr %s300, 64
        %s302 = scalar_lea.vmem [#allocation2], %s301
        // Predicated region
        $region45: #{tpu_custom_call.1} parent=43 // pred_check
          %p303 = pneg %p51
        $region46: #{tpu_custom_call.1} parent=43 // pred_check_branch
          %305 = sbr.rel (%p303) target = $region48
        $region47: #{tpu_custom_call.1} parent=43 // pred_region
          %307 = dma.done %s299, 1024
        $region48: #{tpu_custom_call.1} parent=43 // pred_fallthru
          _
        // Predicated region
        $region49: #{tpu_custom_call.1} parent=43 // pred_check
          %p308 = pneg %p93
        $region50: #{tpu_custom_call.1} parent=43 // pred_check_branch
          %310 = sbr.rel (%p308) target = $region52
        $region51: #{tpu_custom_call.1} parent=43 // pred_region
          %312 = dma.done [#allocation6], 128
        $region52: #{tpu_custom_call.1} parent=43 // pred_fallthru
          _
        // Predicated region
        $region53: #{tpu_custom_call.1} parent=43 // pred_check
          %p313 = pneg %p114
        $region54: #{tpu_custom_call.1} parent=43 // pred_check_branch
          %315 = sbr.rel (%p313) target = $region56
        $region55: #{tpu_custom_call.1} parent=43 // pred_region
          %317 = dma.done [#allocation6], 128
        $region56: #{tpu_custom_call.1} parent=43 // pred_fallthru
          _
        // Predicated region
        $region57: #{tpu_custom_call.1} parent=43 // pred_check
          %p318 = pneg %p135
        $region58: #{tpu_custom_call.1} parent=43 // pred_check_branch
          %320 = sbr.rel (%p318) target = $region60
        $region59: #{tpu_custom_call.1} parent=43 // pred_region
          %322 = dma.done [#allocation9], 128
        $region60: #{tpu_custom_call.1} parent=43 // pred_fallthru
          _
        %s323 = sand.u32 %s38, 1
        %s324 = scalar_lea.sflag [#allocation3], %s323
        %s325 = sand.u32 %s38, 1
        %s326 = smul.addr %s325, 64
        %s327 = scalar_lea.vmem [#allocation2], %s326
        %p328 = pneg %p51
        %p329 = pneg %p48
        %p330 = pneg %p72
        %p331 = pneg %p69
        %p332 = pneg %p93
        %p333 = pneg %p90
        %p334 = pneg %p114
        %p335 = pneg %p111
        %p336 = pneg %p135
        %p337 = pneg %p132
        %p338 = pneg %p156
        %p339 = pneg %p153
        %p340 = pneg %p182
        %p341 = pneg %p179
        %s342 = sand.u32 %s169, 1
        %s343 = scalar_lea.sflag [#allocation4], %s342
        %s344 = sand.u32 %s169, 1
        %s345 = smul.addr %s344, 8
        %s346 = scalar_lea.vmem [#allocation10], %s345
        %p347 = pneg %p208
        %p348 = pneg %p205
        %s349 = sand.u32 %s195, 1
        %s350 = scalar_lea.sflag [#allocation12], %s349
        %s351 = sand.u32 %s195, 1
        %s352 = smul.addr %s351, 16
        %s353 = scalar_lea.vmem [#allocation11], %s352
        %v354 = vld [vmem:[%s302] sm:$0xff]
        %v355 = vld [vmem:[%s302 + $0x8] sm:$0xff]
        %v356 = vld [vmem:[%s302 + $0x10] sm:$0xff]
        %v357 = vld [vmem:[%s302 + $0x18] sm:$0xff]
        %v358 = vld [vmem:[%s302 + $0x20] sm:$0xff]
        %v359 = vld [vmem:[%s302 + $0x28] sm:$0xff]
        %v360 = vld [vmem:[%s302 + $0x30] sm:$0xff]
        %v361 = vld [vmem:[%s302 + $0x38] sm:$0xff]
        %v362 = vld [vmem:[%s1] sm:$0xff]
        %v363 = vld [vmem:[#allocation5] sm:$0xff]
        %v364 = vld [vmem:[#allocation7] sm:$0xff]
        %v365 = vld [vmem:[#allocation8] sm:$0xff]
        %v366 = vld [vmem:[%s5] sm:$0xff]
        %v367 = vmul.f32 %v354, %v354
        %v368 = vmul.f32 %v355, %v355
        %v369 = vmul.f32 %v356, %v356
        %v370 = vmul.f32 %v357, %v357
        %v371 = vmul.f32 %v358, %v358
        %v372 = vmul.f32 %v359, %v359
        %v373 = vmul.f32 %v360, %v360
        %v374 = vmul.f32 %v361, %v361
        %vm375 = vcmask 261120
        %v377 = vsel %vm375, %v363, 0
        %379 = vmatpush.msra.mxu0 0.0
        %380 = vmatpush.msra.mxu0 0.0
        %381 = vmatpush.msra.mxu0 0.0
        %382 = vmatpush.msra.mxu0 0.0
        %383 = vmatpush.msra.mxu0 0.0
        %384 = vmatpush.msra.mxu0 0.0
        %385 = vmatpush.msra.mxu0 0.0
        %386 = vmatpush.msra.mxu0 0.0
        %387 = vmatpush.msra.mxu0 0.0
        %388 = vmatpush.msra.mxu0 0.0
        %389 = vmatpush.msra.mxu0 0.0
        %390 = vmatpush.msra.mxu0 0.0
        %391 = vmatpush.msra.mxu0 %v360
        %392 = vmatpush.msra.mxu0 %v358
        %393 = vmatpush.msra.mxu0 %v356
        %394 = vmatpush.msra.mxu0 %v354
        %395 = vmatmul.f32.gmra.mxu0 %v377
        %v396 = vpop.f32.mrf.mxu0
        %v397 = vadd.f32 0.0, %v396
        %398 = vdwg.mxu0
        %399 = vmatpush.msra.mxu0 0.0
        %400 = vmatpush.msra.mxu0 0.0
        %401 = vmatpush.msra.mxu0 0.0
        %402 = vmatpush.msra.mxu0 0.0
        %403 = vmatpush.msra.mxu0 0.0
        %404 = vmatpush.msra.mxu0 0.0
        %405 = vmatpush.msra.mxu0 0.0
        %406 = vmatpush.msra.mxu0 0.0
        %407 = vmatpush.msra.mxu0 0.0
        %408 = vmatpush.msra.mxu0 0.0
        %409 = vmatpush.msra.mxu0 0.0
        %410 = vmatpush.msra.mxu0 0.0
        %411 = vmatpush.msra.mxu0 %v361
        %412 = vmatpush.msra.mxu0 %v359
        %413 = vmatpush.msra.mxu0 %v357
        %414 = vmatpush.msra.mxu0 %v355
        %415 = vmatmul.f32.gmra.mxu0 %v377
        %v416 = vpop.f32.mrf.mxu0
        %v417 = vadd.f32 0.0, %v416
        %418 = vdwg.mxu0
        %v420 = vsel %vm375, %v362, 0
        %422 = vmatpush.msra.mxu0 0.0
        %423 = vmatpush.msra.mxu0 0.0
        %424 = vmatpush.msra.mxu0 0.0
        %425 = vmatpush.msra.mxu0 0.0
        %426 = vmatpush.msra.mxu0 0.0
        %427 = vmatpush.msra.mxu0 0.0
        %428 = vmatpush.msra.mxu0 0.0
        %429 = vmatpush.msra.mxu0 0.0
        %430 = vmatpush.msra.mxu0 0.0
        %431 = vmatpush.msra.mxu0 0.0
        %432 = vmatpush.msra.mxu0 0.0
        %433 = vmatpush.msra.mxu0 0.0
        %434 = vmatpush.msra.mxu0 %v373
        %435 = vmatpush.msra.mxu0 %v371
        %436 = vmatpush.msra.mxu0 %v369
        %437 = vmatpush.msra.mxu0 %v367
        %438 = vmatmul.f32.gmra.mxu0 %v420
        %v439 = vpop.f32.mrf.mxu0
        %v440 = vadd.f32 %v397, %v439
        %441 = vdwg.mxu0
        %442 = vmatpush.msra.mxu0 0.0
        %443 = vmatpush.msra.mxu0 0.0
        %444 = vmatpush.msra.mxu0 0.0
        %445 = vmatpush.msra.mxu0 0.0
        %446 = vmatpush.msra.mxu0 0.0
        %447 = vmatpush.msra.mxu0 0.0
        %448 = vmatpush.msra.mxu0 0.0
        %449 = vmatpush.msra.mxu0 0.0
        %450 = vmatpush.msra.mxu0 0.0
        %451 = vmatpush.msra.mxu0 0.0
        %452 = vmatpush.msra.mxu0 0.0
        %453 = vmatpush.msra.mxu0 0.0
        %454 = vmatpush.msra.mxu0 %v374
        %455 = vmatpush.msra.mxu0 %v372
        %456 = vmatpush.msra.mxu0 %v370
        %457 = vmatpush.msra.mxu0 %v368
        %458 = vmatmul.f32.gmra.mxu0 %v420
        %v459 = vpop.f32.mrf.mxu0
        %v460 = vadd.f32 %v417, %v459
        %461 = vdwg.mxu0
        %463 = vset.pattern.permute.xlu0 0
        %464 = vperm.xlu0 %463, %v366
        %v465 = vpop.permute.xlu0 %464
        %v467 = vadd.f32 %v440, %v465
        %v468 = vadd.f32 %v460, %v465
        %v469 = vmul.f32 %v467, -0.5
        %v470 = vmul.f32 %v468, -0.5
        %v471 = vrot.slane %v469, 4
        %v472 = vmax.f32 %v469, %v471
        %v473 = vrot.slane %v472, 2
        %v474 = vmax.f32 %v472, %v473
        %v475 = vrot.slane %v474, 1
        %v476 = vmax.f32 %v474, %v475
        %v477 = vrot.slane %v470, 4
        %v478 = vmax.f32 %v470, %v477
        %v479 = vrot.slane %v478, 2
        %v480 = vmax.f32 %v478, %v479
        %v481 = vrot.slane %v480, 1
        %v482 = vmax.f32 %v480, %v481
        %v483 = vsub.f32 %v469, %v476
        %v484 = vsub.f32 %v470, %v482
        %v485 = vmul.f32 %v483, 1.442695
        %v486 = vpow.pop %v485
        %v487 = vmul.f32 %v484, 1.442695
        %v488 = vpow.pop %v487
        %v489 = vrot.slane %v486, 4
        %v490 = vadd.f32 %v486, %v489
        %v491 = vrot.slane %v490, 2
        %v492 = vadd.f32 %v490, %v491
        %v493 = vrot.slane %v492, 1
        %v494 = vadd.f32 %v492, %v493
        %v495 = vrot.slane %v488, 4
        %v496 = vadd.f32 %v488, %v495
        %v497 = vrot.slane %v496, 2
        %v498 = vadd.f32 %v496, %v497
        %v499 = vrot.slane %v498, 1
        %v500 = vadd.f32 %v498, %v499
        %v501 = vrcp.pop %v494
        %v502 = vmul.f32 %v494, %v501
        %v503 = vsub.f32 1.0, %v502
        %v504 = vmul.f32 %v501, %v503
        %v505 = vadd.f32 %v501, %v504
        %vm506 = vweird.f32 %v494
        %vm507 = vweird.f32 %v501
        %vm508 = vmor %vm506, %vm507
        %v509 = vsel %vm508, %v501, %v505
        %v510 = vand.u32 2147483647, %v494
        %vm511 = vcmp.eq.f32.partialorder %v510, 8.507059e+37
        %v512 = vand.u32 %v494, 2147483648
        %v513 = vor.u32 1.1754944e-38, %v512
        %v514 = vsel %vm511, %v513, %v509
        %v515 = vrcp.pop %v500
        %v516 = vmul.f32 %v500, %v515
        %v517 = vsub.f32 1.0, %v516
        %v518 = vmul.f32 %v515, %v517
        %v519 = vadd.f32 %v515, %v518
        %vm520 = vweird.f32 %v500
        %vm521 = vweird.f32 %v515
        %vm522 = vmor %vm520, %vm521
        %v523 = vsel %vm522, %v515, %v519
        %v524 = vand.u32 2147483647, %v500
        %vm525 = vcmp.eq.f32.partialorder %v524, 8.507059e+37
        %v526 = vand.u32 %v500, 2147483648
        %v527 = vor.u32 1.1754944e-38, %v526
        %v528 = vsel %vm525, %v527, %v523
        %v529 = vmul.f32 %v486, %v514
        %v530 = vmul.f32 %v488, %v528
        %v531 = vadd.f32 %v529, %v530
        %532 = vadd.xlane.f32.xlu0 %v531
        %v533 = vpop.xlane.xlu0 %532
        %534 = vmatpush.xpose.msra.mxu0 0.0
        %535 = vmatpush.xpose.msra.mxu0 0.0
        %536 = vmatpush.xpose.msra.mxu0 0.0
        %537 = vmatpush.xpose.msra.mxu0 0.0
        %538 = vmatpush.xpose.msra.mxu0 0.0
        %539 = vmatpush.xpose.msra.mxu0 0.0
        %540 = vmatpush.xpose.msra.mxu0 0.0
        %541 = vmatpush.xpose.msra.mxu0 0.0
        %542 = vmatpush.xpose.msra.mxu0 0.0
        %543 = vmatpush.xpose.msra.mxu0 0.0
        %544 = vmatpush.xpose.msra.mxu0 0.0
        %545 = vmatpush.xpose.msra.mxu0 0.0
        %546 = vmatpush.xpose.msra.mxu0 %v360
        %547 = vmatpush.xpose.msra.mxu0 %v358
        %548 = vmatpush.xpose.msra.mxu0 %v356
        %549 = vmatpush.xpose.msra.mxu0 %v354
        %550 = vmatmul.f32.gmra.mxu0 %v529
        %v551 = vpop.f32.mrf.mxu0
        %v552 = vadd.f32 0.0, %v551
        %553 = vdwg.mxu0
        %554 = vmatpush.xpose.msra.mxu0 0.0
        %555 = vmatpush.xpose.msra.mxu0 0.0
        %556 = vmatpush.xpose.msra.mxu0 0.0
        %557 = vmatpush.xpose.msra.mxu0 0.0
        %558 = vmatpush.xpose.msra.mxu0 0.0
        %559 = vmatpush.xpose.msra.mxu0 0.0
        %560 = vmatpush.xpose.msra.mxu0 0.0
        %561 = vmatpush.xpose.msra.mxu0 0.0
        %562 = vmatpush.xpose.msra.mxu0 0.0
        %563 = vmatpush.xpose.msra.mxu0 0.0
        %564 = vmatpush.xpose.msra.mxu0 0.0
        %565 = vmatpush.xpose.msra.mxu0 0.0
        %566 = vmatpush.xpose.msra.mxu0 %v361
        %567 = vmatpush.xpose.msra.mxu0 %v359
        %568 = vmatpush.xpose.msra.mxu0 %v357
        %569 = vmatpush.xpose.msra.mxu0 %v355
        %570 = vmatmul.f32.gmra.mxu0 %v530
        %v571 = vpop.f32.mrf.mxu0
        %v572 = vadd.f32 %v552, %v571
        %573 = vdwg.mxu0
        %v574 = vmul.f32 %v533, %v365
        %v575 = vsub.f32 %v572, %v574
        %v576 = vmul.f32 %v364, %v575
        %v577 = vadd.f32 %v533, 1e-07
        %v578 = vrcp.pop %v577
        %v579 = vmul.f32 %v577, %v578
        %v580 = vsub.f32 1.0, %v579
        %v581 = vmul.f32 %v578, %v580
        %v582 = vadd.f32 %v578, %v581
        %vm583 = vweird.f32 %v577
        %vm584 = vweird.f32 %v578
        %vm585 = vmor %vm583, %vm584
        %v586 = vsel %vm585, %v578, %v582
        %v587 = vand.u32 2147483647, %v577
        %vm588 = vcmp.eq.f32.partialorder %v587, 8.507059e+37
        %v589 = vand.u32 %v577, 2147483648
        %v590 = vor.u32 1.1754944e-38, %v589
        %v591 = vsel %vm588, %v590, %v586
        %v592 = vmul.f32 %v576, %v591
        %v593 = vmul.f32 %v592, %v592
        %v594 = vsel %vm375, %v593, 0.0
        %595 = vadd.xlane.f32.xlu0 %v594
        %v596 = vpop.xlane.xlu0 %595
        %v597 = vmax.f32 %v596, 1e-24
        %v598 = vrsqrt.pop %v597
        %v599 = vmul.f32 %v598, %v597
        %v600 = vmul.f32 %v599, %v598
        %v601 = vmul.f32 0.5, %v600
        %v602 = vsub.f32 1.5, %v601
        %v603 = vmul.f32 %v598, %v602
        %vm604 = vweird.f32 %v597
        %vm605 = vweird.f32 %v598
        %vm606 = vmor %vm604, %vm605
        %v607 = vsel %vm606, %v598, %v603
        %v608 = vmul.f32 %v592, %v607
        %v609 = vmul.f32 %v608, %v608
        %v610 = vsel %vm375, %v609, 0.0
        %611 = vadd.xlane.f32.xlu0 %v610
        %v612 = vpop.xlane.xlu0 %611
        %v613 = vrot.slane %v612, 4
        %v614 = vadd.f32 %v612, %v613
        %v615 = vrot.slane %v614, 2
        %v616 = vadd.f32 %v614, %v615
        %v617 = vrot.slane %v616, 1
        %v618 = vadd.f32 %v616, %v617
        %s619 = vtos %v618
        %s620 = smax.f32 %s619, 1e-24
        %v621 = vstv %s620
        %v622 = vrsqrt.pop %v621
        %v623 = vmul.f32 %v622, %v621
        %v624 = vmul.f32 %v623, %v622
        %v625 = vmul.f32 0.5, %v624
        %v626 = vsub.f32 1.5, %v625
        %v627 = vmul.f32 %v622, %v626
        %vm628 = vweird.f32 %v621
        %vm629 = vweird.f32 %v622
        %vm630 = vmor %vm628, %vm629
        %v631 = vsel %vm630, %v622, %v627
        %s632 = vtos %v631
        %v633 = vstv %s632
        %v634 = vmul.f32 %v608, %v633
        %635 = vst.msk [vmem:[%s346] sm:$0xff] %vm375, %v634
        %636 = vst [vmem:[%s353] sm:$0xff] %v529
        %637 = vst [vmem:[%s353 + $0x8] sm:$0xff] %v530
        %s638 = sand.u32 %s169, 1
        %s639 = scalar_lea.sflag [#allocation4], %s638
        %s640 = sand.u32 %s169, 1
        %s641 = smul.addr %s640, 8
        %s642 = scalar_lea.vmem [#allocation10], %s641
        %s643 = sand.u32 %s195, 1
        %s644 = scalar_lea.sflag [#allocation12], %s643
        %s645 = sand.u32 %s195, 1
        %s646 = smul.addr %s645, 16
        %s647 = scalar_lea.vmem [#allocation11], %s646
        // Predicated region
        $region61: #{tpu_custom_call.1} parent=43 // pred_check
          %p648 = pneg %p179
        $region62: #{tpu_custom_call.1} parent=43 // pred_check_branch
          %650 = sbr.rel (%p648) target = $region64
        $region63: #{tpu_custom_call.1} parent=43 // pred_region
          %652 = vsyncadd %s639, 0
          %s653 = smul.addr %s30, 8
          %s654 = scalar_lea.hbm %s6, %s653
          %s656 = sshll.u32 %s642, 4
          %s657 = int_to_ptr.vmem [resolvable:$true] %s656
          %s658 = sshll.u32 %s654, 4
          %s659 = int_to_ptr.hbm [resolvable:$true] %s658
          %661 = dma.vmem_to_hbm [thread:$0]  %s657, 128, %s659, %s639
        $region64: #{tpu_custom_call.1} parent=43 // pred_fallthru
          _
        // Predicated region
        $region65: #{tpu_custom_call.1} parent=43 // pred_check
          %p662 = pneg %p205
        $region66: #{tpu_custom_call.1} parent=43 // pred_check_branch
          %664 = sbr.rel (%p662) target = $region68
        $region67: #{tpu_custom_call.1} parent=43 // pred_region
          %666 = vsyncadd %s644, 0
          %s667 = smul.addr %s30, 2
          %s668 = smul.addr %s667, 8
          %s669 = scalar_lea.hbm %s7, %s668
          %s671 = sshll.u32 %s647, 4
          %s672 = int_to_ptr.vmem [resolvable:$true] %s671
          %s673 = sshll.u32 %s669, 4
          %s674 = int_to_ptr.hbm [resolvable:$true] %s673
          %676 = dma.vmem_to_hbm [thread:$0]  %s672, 256, %s674, %s644
        $region68: #{tpu_custom_call.1} parent=43 // pred_fallthru
          _
      $region44: #{tpu_custom_call.1} parent=5 // pred_fallthru
        _
      %p677 = scmp.le.s32.totalorder 2, %s25
      // Predicated region
      $region69: #{tpu_custom_call.1} parent=5 // pred_check
        %p678 = pneg %p677
      $region70: #{tpu_custom_call.1} parent=5 // pred_check_branch
        %680 = sbr.rel (%p678) target = $region72
      $region71: #{tpu_custom_call.1} parent=5 // pred_region
        %s681 = ssub.s32 %s25, 2
        // Predicated region
        $region73: #{tpu_custom_call.1} parent=71 // pred_check
          %p682 = pneg %p185
        $region74: #{tpu_custom_call.1} parent=71 // pred_check_branch
          %684 = sbr.rel (%p682) target = $region76
        $region75: #{tpu_custom_call.1} parent=71 // pred_region
          %s685 = sand.u32 %s170, 1
          %s686 = scalar_lea.sflag [#allocation4], %s685
          %s687 = sand.u32 %s170, 1
          %s688 = smul.addr %s687, 8
          %s689 = scalar_lea.vmem [#allocation10], %s688
          %691 = dma.done %s686, 128
        $region76: #{tpu_custom_call.1} parent=71 // pred_fallthru
          _
        // Predicated region
        $region77: #{tpu_custom_call.1} parent=71 // pred_check
          %p692 = pneg %p211
        $region78: #{tpu_custom_call.1} parent=71 // pred_check_branch
          %694 = sbr.rel (%p692) target = $region80
        $region79: #{tpu_custom_call.1} parent=71 // pred_region
          %s695 = sand.u32 %s196, 1
          %s696 = scalar_lea.sflag [#allocation12], %s695
          %s697 = sand.u32 %s196, 1
          %s698 = smul.addr %s697, 16
          %s699 = scalar_lea.vmem [#allocation11], %s698
          %701 = dma.done %s696, 256
        $region80: #{tpu_custom_call.1} parent=71 // pred_fallthru
          _
      $region72: #{tpu_custom_call.1} parent=5 // pred_fallthru
        _
    $region6: #{tpu_custom_call.1} parent=1 // loop_footer
      %s29 = sadd.s32 1, %s25
    $region7: #{tpu_custom_call.1} parent=1 // loop_footer_branch
      %24 = sbr.rel target = $region3
    $region8: #{tpu_custom_call.1} parent=1 // loop_exit
      _
    %702 = vsyncpa [#allocation3], 1
    %s703 = scalar_lea.sflag [#allocation3], 1
    %704 = vsyncpa %s703, 1
    %705 = vsyncpa [#allocation6], 1
    %706 = vsyncpa [#allocation9], 1
    %707 = vsyncpa [#allocation4], 1
    %s708 = scalar_lea.sflag [#allocation4], 1
    %709 = vsyncpa %s708, 1
    %710 = vsyncpa [#allocation12], 1
    %s711 = scalar_lea.sflag [#allocation12], 1
    %712 = vsyncpa %s711, 1

</llo_original>
